<compile_context>
chip_gen: v6e
topology: v6e:2x2x1
jax: 0.10.0
libtpu: 0.0.40
codegen_flags: <defaults>
</compile_context>

<pallas_src>
import math

import jax
import jax.numpy as jnp
from jax.experimental import pallas as pl
from jax.experimental.pallas import tpu as pltpu

_SUBLANES = 8        # f32 sublane multiple; hidden widths padded to this only
_FMA_K_MAX = 16      # first layer uses VPU broadcast-FMAs when fan_in <= this


def _round_up(n: int, m: int) -> int:
    return ((n + m - 1) // m) * m


def _make_mlp_kernel(n_layers: int, first_layer_fma: bool):
    """Fused MLP kernel. Signature: (x_ref, w0, b0, ..., w{L-1}, b{L-1}, out_ref)."""

    def kernel(x_ref, *refs):
        out_ref = refs[-1]
        h = x_ref[...].astype(jnp.float32)            # mirrors `x = x.float()`
        for i in range(n_layers):
            w = refs[2 * i][...]                      # f32 [in_i, out_i]
            b = refs[2 * i + 1][...]                  # f32 [1,   out_i]
            if i == 0 and first_layer_fma:
                # Tiny-K layer: K VPU broadcast-FMAs, bias folded into the
                # initial term.  Exact f32, no MXU round trip on the critical
                # path.
                acc = b + h[:, 0:1] * w[0:1, :]
                for k in range(1, w.shape[0]):
                    acc = acc + h[:, k:k + 1] * w[k:k + 1, :]
                h = acc
            else:
                # f32 operands, f32 accumulation (PyTorch nn.Linear semantics).
                h = jnp.dot(h, w, preferred_element_type=jnp.float32) + b
            if i < n_layers - 1:
                h = jnp.maximum(h, 0.0)               # ReLU between layers only
        out_ref[...] = h.astype(out_ref.dtype)        # true-width store, no slice

    return kernel


def metadata_fc_block_forward(x, layers):
    """layers: list of (w f32 [in_i, out_i], b f32 [1, out_i]) from init.

    Returns the [B, output_size] f32 result directly (no post-call slicing).
    """
    n_layers = len(layers)
    x = x.astype(jnp.float32)
    B = x.shape[0]
    out_w = layers[-1][0].shape[1]                    # true output width
    first_layer_fma = layers[0][0].shape[0] <= _FMA_K_MAX

    flat_inputs = [x]
    for w, b in layers:
        flat_inputs += [w, b]

    flops = 2 * B * sum(int(w.shape[0]) * int(w.shape[1]) for w, _ in layers)
    bytes_accessed = (
        x.size * x.dtype.itemsize
        + sum(w.size * w.dtype.itemsize + b.size * b.dtype.itemsize
              for w, b in layers)
        + B * out_w * 4
    )

    vmem = pl.BlockSpec(memory_space=pltpu.MemorySpace.VMEM)
    # Grid-less call: whole arrays resident in VMEM, no pipelining machinery.
    return pl.pallas_call(
        _make_mlp_kernel(n_layers, first_layer_fma),
        out_shape=jax.ShapeDtypeStruct((B, out_w), jnp.float32),
        in_specs=[vmem] * len(flat_inputs),
        out_specs=vmem,
        cost_estimate=pl.CostEstimate(
            flops=flops, transcendentals=0, bytes_accessed=bytes_accessed),
    )(*flat_inputs)


def init_metadata_fc_block(key, input_size, output_size, hidden_size=None, n_hidden=0):
    """Build params once. Returns (layers_packed, layers_f32).

    layers_packed : kernel-ready f32 (w [in_i, out_i], b [1, out_i]); hidden
                    widths zero-padded to a multiple of 8 (f32 sublane), the
                    final layer kept at its true width.
    layers_f32    : logical f32 ([in, out], [out]) params (PyTorch semantics).
    Init mimics nn.Linear's default U(-1/sqrt(fan_in), 1/sqrt(fan_in)).
    Zero padding keeps the math exact: padded hidden units have zero weight
    columns and zero bias (activation exactly 0) and zero weight rows into the
    next layer.
    """
    if hidden_size is None:
        hidden_size = output_size
    if n_hidden == 0:
        dims = [(input_size, output_size)]
    else:
        dims = ([(input_size, hidden_size)]
                + [(hidden_size, hidden_size)] * (n_hidden - 1)
                + [(hidden_size, output_size)])

    layers_packed, layers_f32 = [], []
    in_pad = input_size                  # first-layer K is x's width; never padded
    n = len(dims)
    for li, (fan_in, fan_out) in enumerate(dims):
        key, kw, kb = jax.random.split(key, 3)
        bound = 1.0 / math.sqrt(fan_in)
        w = jax.random.uniform(kw, (fan_in, fan_out), jnp.float32, -bound, bound)
        b = jax.random.uniform(kb, (fan_out,), jnp.float32, -bound, bound)
        layers_f32.append((w, b))

        is_last = (li == n - 1)
        out_pad = fan_out if is_last else _round_up(fan_out, _SUBLANES)
        w_p = jnp.zeros((in_pad, out_pad), jnp.float32).at[:fan_in, :fan_out].set(w)
        b_p = jnp.zeros((1, out_pad), jnp.float32).at[0, :fan_out].set(b)
        layers_packed.append((w_p, b_p))
        in_pad = out_pad
    return layers_packed, layers_f32


def _reference_forward_f32(x, layers_f32):
    """PyTorch-module semantics in exact f32 (HIGHEST-precision dots)."""
    h = x.astype(jnp.float32)
    for i, (w, b) in enumerate(layers_f32):
        h = jnp.dot(h, w, precision=jax.lax.Precision.HIGHEST) + b
        if i < len(layers_f32) - 1:
            h = jnp.maximum(h, 0.0)
    return h


if __name__ == "__main__":
    key = jax.random.PRNGKey(0)
    kx, kp = jax.random.split(key)

    # Small shapes consistent with the module: one metadata vector per sample.
    B = 4
    input_size = 6
    hidden_size = 32
    output_size = 16
    n_hidden = 2   # -> Linear(6,32) ReLU Linear(32,32) ReLU Linear(32,16)

    x = jax.random.normal(kx, (B, input_size), dtype=jnp.float32)
    layers_packed, layers_f32 = init_metadata_fc_block(
        kp, input_size, output_size, hidden_size, n_hidden)

    fwd = jax.jit(metadata_fc_block_forward)
    out = fwd(x, layers_packed)
    jax.block_until_ready(out)

    assert out.shape == (B, output_size)
    ref_f32 = _reference_forward_f32(x, layers_f32)
    assert jnp.allclose(out, ref_f32, atol=1e-2, rtol=1e-2), (
        f"max abs err {jnp.max(jnp.abs(out - ref_f32))}")

    print("KERNEL_OK")
</pallas_src>

<mosaic_0001>
module attributes {stable_mosaic.version = 11 : i64} {
  func.func @kernel(%arg0: memref<4x6xf32, #tpu.memory_space<vmem>>, %arg1: memref<6x32xf32, #tpu.memory_space<vmem>>, %arg2: memref<1x32xf32, #tpu.memory_space<vmem>>, %arg3: memref<32x32xf32, #tpu.memory_space<vmem>>, %arg4: memref<1x32xf32, #tpu.memory_space<vmem>>, %arg5: memref<32x16xf32, #tpu.memory_space<vmem>>, %arg6: memref<1x16xf32, #tpu.memory_space<vmem>>, %arg7: memref<4x16xf32, #tpu.memory_space<vmem>>) attributes {dimension_semantics = [], scalar_prefetch = 0 : i64, scratch_operands = 0 : i64, tpu.core_type = #tpu.core_type<tc>} {
    %c0 = arith.constant 0 : index
    %c0_0 = arith.constant 0 : index
    %0 = vector.load %arg0[%c0, %c0_0] : memref<4x6xf32, #tpu.memory_space<vmem>>, vector<4x6xf32>
    %c0_1 = arith.constant 0 : index
    %c0_2 = arith.constant 0 : index
    %1 = vector.load %arg1[%c0_1, %c0_2] : memref<6x32xf32, #tpu.memory_space<vmem>>, vector<6x32xf32>
    %c0_3 = arith.constant 0 : index
    %c0_4 = arith.constant 0 : index
    %2 = vector.load %arg2[%c0_3, %c0_4] : memref<1x32xf32, #tpu.memory_space<vmem>>, vector<1x32xf32>
    %3 = vector.extract_strided_slice %0 {offsets = [0, 0], sizes = [4, 1], strides = [1, 1]} : vector<4x6xf32> to vector<4x1xf32>
    %4 = vector.extract_strided_slice %1 {offsets = [0, 0], sizes = [1, 32], strides = [1, 1]} : vector<6x32xf32> to vector<1x32xf32>
    %5 = vector.broadcast %3 : vector<4x1xf32> to vector<4x32xf32>
    %6 = vector.broadcast %4 : vector<1x32xf32> to vector<4x32xf32>
    %7 = arith.mulf %5, %6 : vector<4x32xf32>
    %8 = vector.broadcast %2 : vector<1x32xf32> to vector<4x32xf32>
    %9 = arith.addf %8, %7 : vector<4x32xf32>
    %10 = vector.extract_strided_slice %0 {offsets = [0, 1], sizes = [4, 1], strides = [1, 1]} : vector<4x6xf32> to vector<4x1xf32>
    %11 = vector.extract_strided_slice %1 {offsets = [1, 0], sizes = [1, 32], strides = [1, 1]} : vector<6x32xf32> to vector<1x32xf32>
    %12 = vector.broadcast %10 : vector<4x1xf32> to vector<4x32xf32>
    %13 = vector.broadcast %11 : vector<1x32xf32> to vector<4x32xf32>
    %14 = arith.mulf %12, %13 : vector<4x32xf32>
    %15 = arith.addf %9, %14 : vector<4x32xf32>
    %16 = vector.extract_strided_slice %0 {offsets = [0, 2], sizes = [4, 1], strides = [1, 1]} : vector<4x6xf32> to vector<4x1xf32>
    %17 = vector.extract_strided_slice %1 {offsets = [2, 0], sizes = [1, 32], strides = [1, 1]} : vector<6x32xf32> to vector<1x32xf32>
    %18 = vector.broadcast %16 : vector<4x1xf32> to vector<4x32xf32>
    %19 = vector.broadcast %17 : vector<1x32xf32> to vector<4x32xf32>
    %20 = arith.mulf %18, %19 : vector<4x32xf32>
    %21 = arith.addf %15, %20 : vector<4x32xf32>
    %22 = vector.extract_strided_slice %0 {offsets = [0, 3], sizes = [4, 1], strides = [1, 1]} : vector<4x6xf32> to vector<4x1xf32>
    %23 = vector.extract_strided_slice %1 {offsets = [3, 0], sizes = [1, 32], strides = [1, 1]} : vector<6x32xf32> to vector<1x32xf32>
    %24 = vector.broadcast %22 : vector<4x1xf32> to vector<4x32xf32>
    %25 = vector.broadcast %23 : vector<1x32xf32> to vector<4x32xf32>
    %26 = arith.mulf %24, %25 : vector<4x32xf32>
    %27 = arith.addf %21, %26 : vector<4x32xf32>
    %28 = vector.extract_strided_slice %0 {offsets = [0, 4], sizes = [4, 1], strides = [1, 1]} : vector<4x6xf32> to vector<4x1xf32>
    %29 = vector.extract_strided_slice %1 {offsets = [4, 0], sizes = [1, 32], strides = [1, 1]} : vector<6x32xf32> to vector<1x32xf32>
    %30 = vector.broadcast %28 : vector<4x1xf32> to vector<4x32xf32>
    %31 = vector.broadcast %29 : vector<1x32xf32> to vector<4x32xf32>
    %32 = arith.mulf %30, %31 : vector<4x32xf32>
    %33 = arith.addf %27, %32 : vector<4x32xf32>
    %34 = vector.extract_strided_slice %0 {offsets = [0, 5], sizes = [4, 1], strides = [1, 1]} : vector<4x6xf32> to vector<4x1xf32>
    %35 = vector.extract_strided_slice %1 {offsets = [5, 0], sizes = [1, 32], strides = [1, 1]} : vector<6x32xf32> to vector<1x32xf32>
    %36 = vector.broadcast %34 : vector<4x1xf32> to vector<4x32xf32>
    %37 = vector.broadcast %35 : vector<1x32xf32> to vector<4x32xf32>
    %38 = arith.mulf %36, %37 : vector<4x32xf32>
    %39 = arith.addf %33, %38 : vector<4x32xf32>
    %cst = arith.constant 0.000000e+00 : f32
    %40 = vector.broadcast %cst : f32 to vector<4x32xf32>
    %41 = arith.maximumf %39, %40 : vector<4x32xf32>
    %c0_5 = arith.constant 0 : index
    %c0_6 = arith.constant 0 : index
    %42 = vector.load %arg3[%c0_5, %c0_6] : memref<32x32xf32, #tpu.memory_space<vmem>>, vector<32x32xf32>
    %c0_7 = arith.constant 0 : index
    %c0_8 = arith.constant 0 : index
    %43 = vector.load %arg4[%c0_7, %c0_8] : memref<1x32xf32, #tpu.memory_space<vmem>>, vector<1x32xf32>
    %cst_9 = arith.constant dense<0.000000e+00> : vector<4x32xf32>
    %44 = tpu.matmul %41, %42, %cst_9 {dimension_numbers = #tpu.dot_dimension_numbers<[1], [0], [0], [1], [0, 0, 1, 1], [], []>} : vector<4x32xf32>, vector<32x32xf32>, vector<4x32xf32> -> vector<4x32xf32>
    %45 = vector.broadcast %43 : vector<1x32xf32> to vector<4x32xf32>
    %46 = arith.addf %44, %45 : vector<4x32xf32>
    %cst_10 = arith.constant 0.000000e+00 : f32
    %47 = vector.broadcast %cst_10 : f32 to vector<4x32xf32>
    %48 = arith.maximumf %46, %47 : vector<4x32xf32>
    %c0_11 = arith.constant 0 : index
    %c0_12 = arith.constant 0 : index
    %49 = vector.load %arg5[%c0_11, %c0_12] : memref<32x16xf32, #tpu.memory_space<vmem>>, vector<32x16xf32>
    %c0_13 = arith.constant 0 : index
    %c0_14 = arith.constant 0 : index
    %50 = vector.load %arg6[%c0_13, %c0_14] : memref<1x16xf32, #tpu.memory_space<vmem>>, vector<1x16xf32>
    %cst_15 = arith.constant dense<0.000000e+00> : vector<4x16xf32>
    %51 = tpu.matmul %48, %49, %cst_15 {dimension_numbers = #tpu.dot_dimension_numbers<[1], [0], [0], [1], [0, 0, 1, 1], [], []>} : vector<4x32xf32>, vector<32x16xf32>, vector<4x16xf32> -> vector<4x16xf32>
    %52 = vector.broadcast %50 : vector<1x16xf32> to vector<4x16xf32>
    %53 = arith.addf %51, %52 : vector<4x16xf32>
    %c0_16 = arith.constant 0 : index
    %c0_17 = arith.constant 0 : index
    %54 = vector.load %arg7[%c0_16, %c0_17] : memref<4x16xf32, #tpu.memory_space<vmem>>, vector<4x16xf32>
    tpu.vector_store %arg7[%c0_16, %c0_17], %53 {strides = array<i32>} : memref<4x16xf32, #tpu.memory_space<vmem>>, vector<4x16xf32>,
    return
  }
}

</mosaic_0001>

<llo_original>
// kernel: metadata_fc_block_forward.1
$region0: #{metadata_fc_block_forward.1}
  #allocation0 [shape = 'u32[]', space=smem, size = 0x4, offset = 0x4, fixed_abs, tag = 'smem constant byte address 0x4 - core index']
  #allocation1 [shape = 'u32[144,128]{1,0:T(1,128)}', space=vmem, size = 0x12000, scoped, tag = 'internal scratch']
  %s0 = inlined_call_operand.vmem [shape: f32[4,6], index: 0, kind: input, shape index: {}]
  %s1 = inlined_call_operand.vmem [shape: f32[6,32], index: 1, kind: input, shape index: {}]
  %s2 = inlined_call_operand.vmem [shape: f32[1,32], index: 2, kind: input, shape index: {}]
  %s3 = inlined_call_operand.vmem [shape: f32[32,32], index: 3, kind: input, shape index: {}]
  %s4 = inlined_call_operand.vmem [shape: f32[1,32], index: 4, kind: input, shape index: {}]
  %s5 = inlined_call_operand.vmem [shape: f32[32,16], index: 5, kind: input, shape index: {}]
  %s6 = inlined_call_operand.vmem [shape: f32[1,16], index: 6, kind: input, shape index: {}]
  %s7 = inlined_call_operand.hbm [shape: f32[4,16], index: 7, kind: output, shape index: {}]
  %s8 = sld [smem:[#allocation0]]
  $region38: #{metadata_fc_block_forward.1} parent=0
    _
  %s10 = ssub.s32 1, %s8
  %s11 = scalar_select 0, %s10, %s8
  $region1: #{metadata_fc_block_forward.1} parent=0
    #allocation2 [shape = 'u8[2048]{0}', space=vmem, size = 0x800, scoped, tag = 'output window, operand 0, single buffered']
    #allocation3 [shape = 's32[1]{0}', space=sflag, size = 0x4, scoped, tag = 'scoped memory for metadata_fc_block_forward.1']
    %12 = vsyncpa [#allocation3], 0
    // Predicated region
    $region2: #{metadata_fc_block_forward.1} parent=1 // pred_check
      _
    $region3: #{metadata_fc_block_forward.1} parent=1 // pred_check_branch
      %14 = sbr.rel (0) target = $region5
    $region4: #{metadata_fc_block_forward.1} parent=1 // pred_region
      _
    $region5: #{metadata_fc_block_forward.1} parent=1 // pred_fallthru
      _
    // Predicated region
    $region6: #{metadata_fc_block_forward.1} parent=1 // pred_check
      _
    $region7: #{metadata_fc_block_forward.1} parent=1 // pred_check_branch
      %16 = sbr.rel (0) target = $region9
    $region8: #{metadata_fc_block_forward.1} parent=1 // pred_region
      _
    $region9: #{metadata_fc_block_forward.1} parent=1 // pred_fallthru
      _
    // Predicated region
    $region10: #{metadata_fc_block_forward.1} parent=1 // pred_check
      _
    $region11: #{metadata_fc_block_forward.1} parent=1 // pred_check_branch
      %18 = sbr.rel (0) target = $region13
    $region12: #{metadata_fc_block_forward.1} parent=1 // pred_region
      _
    $region13: #{metadata_fc_block_forward.1} parent=1 // pred_fallthru
      _
    // Predicated region
    $region14: #{metadata_fc_block_forward.1} parent=1 // pred_check
      _
    $region15: #{metadata_fc_block_forward.1} parent=1 // pred_check_branch
      %20 = sbr.rel (0) target = $region17
    $region16: #{metadata_fc_block_forward.1} parent=1 // pred_region
      _
    $region17: #{metadata_fc_block_forward.1} parent=1 // pred_fallthru
      _
    // Predicated region
    $region18: #{metadata_fc_block_forward.1} parent=1 // pred_check
      _
    $region19: #{metadata_fc_block_forward.1} parent=1 // pred_check_branch
      %22 = sbr.rel (0) target = $region21
    $region20: #{metadata_fc_block_forward.1} parent=1 // pred_region
      _
    $region21: #{metadata_fc_block_forward.1} parent=1 // pred_fallthru
      _
    // Predicated region
    $region22: #{metadata_fc_block_forward.1} parent=1 // pred_check
      _
    $region23: #{metadata_fc_block_forward.1} parent=1 // pred_check_branch
      %24 = sbr.rel (0) target = $region25
    $region24: #{metadata_fc_block_forward.1} parent=1 // pred_region
      _
    $region25: #{metadata_fc_block_forward.1} parent=1 // pred_fallthru
      _
    // Predicated region
    $region26: #{metadata_fc_block_forward.1} parent=1 // pred_check
      _
    $region27: #{metadata_fc_block_forward.1} parent=1 // pred_check_branch
      %26 = sbr.rel (0) target = $region29
    $region28: #{metadata_fc_block_forward.1} parent=1 // pred_region
      _
    $region29: #{metadata_fc_block_forward.1} parent=1 // pred_fallthru
      _
    %v27 = vld [vmem:[%s0] sm:$0xf]
    %v28 = vld [vmem:[%s1] sm:$0x3f]
    %v29 = vld [vmem:[%s2] sm:$0x1]
    %31 = vset.pattern.permute.xlu0 0
    %32 = vperm.xlu0 %31, %v27
    %v33 = vpop.permute.xlu0 %32
    %v35 = vlaneseq
    %v36 = vshrl.u32 %v35, 7
    %v37 = vsub.s32 0, %v36
    %v38 = vrot.slane %v28, %v37
    %v39 = vmul.f32 %v33, %v38
    %v41 = vlaneseq
    %v42 = vshrl.u32 %v41, 7
    %v43 = vsub.s32 0, %v42
    %v44 = vrot.slane %v29, %v43
    %v46 = vadd.f32 %v44, %v39
    %47 = vset.pattern.permute.xlu0 1
    %48 = vperm.xlu0 %47, %v27
    %v49 = vpop.permute.xlu0 %48
    %v51 = vlaneseq
    %v52 = vshrl.u32 %v51, 7
    %v53 = vsub.s32 1, %v52
    %v54 = vrot.slane %v28, %v53
    %v55 = vmul.f32 %v49, %v54
    %v56 = vadd.f32 %v46, %v55
    %57 = vset.pattern.permute.xlu0 2
    %58 = vperm.xlu0 %57, %v27
    %v59 = vpop.permute.xlu0 %58
    %v61 = vlaneseq
    %v62 = vshrl.u32 %v61, 7
    %v63 = vsub.s32 2, %v62
    %v64 = vrot.slane %v28, %v63
    %v65 = vmul.f32 %v59, %v64
    %v66 = vadd.f32 %v56, %v65
    %67 = vset.pattern.permute.xlu0 3
    %68 = vperm.xlu0 %67, %v27
    %v69 = vpop.permute.xlu0 %68
    %v71 = vlaneseq
    %v72 = vshrl.u32 %v71, 7
    %v73 = vsub.s32 3, %v72
    %v74 = vrot.slane %v28, %v73
    %v75 = vmul.f32 %v69, %v74
    %v76 = vadd.f32 %v66, %v75
    %77 = vset.pattern.permute.xlu0 4
    %78 = vperm.xlu0 %77, %v27
    %v79 = vpop.permute.xlu0 %78
    %v81 = vlaneseq
    %v82 = vshrl.u32 %v81, 7
    %v83 = vsub.s32 4, %v82
    %v84 = vrot.slane %v28, %v83
    %v85 = vmul.f32 %v79, %v84
    %v86 = vadd.f32 %v76, %v85
    %87 = vset.pattern.permute.xlu0 5
    %88 = vperm.xlu0 %87, %v27
    %v89 = vpop.permute.xlu0 %88
    %v91 = vlaneseq
    %v92 = vshrl.u32 %v91, 7
    %v93 = vsub.s32 5, %v92
    %v94 = vrot.slane %v28, %v93
    %v95 = vmul.f32 %v89, %v94
    %v96 = vadd.f32 %v86, %v95
    %v97 = vmax.f32 %v96, 0.0
    %v98 = vld [vmem:[%s3] sm:$0xff]
    %v99 = vld [vmem:[%s3 + $0x8] sm:$0xff]
    %v100 = vld [vmem:[%s3 + $0x10] sm:$0xff]
    %v101 = vld [vmem:[%s3 + $0x18] sm:$0xff]
    %v102 = vld [vmem:[%s4] sm:$0x1]
    %v104 = vlaneseq
    %v105 = vshrl.u32 %v104, 7
    %v106 = vsub.s32 0, %v105
    %v107 = vrot.slane %v102, %v106
    %vm109 = vcmask 261120
    %v111 = vsel %vm109, %v97, 0
    %113 = vmatprep.subr.mxu0 0.0
    %114 = vmatpush1.msra.mxu0 0.0
    %115 = vmatprep.subr.mxu0 0.0
    %116 = vmatpush1.msra.mxu0 0.0
    %117 = vmatprep.subr.mxu0 0.0
    %118 = vmatpush1.msra.mxu0 0.0
    %119 = vmatprep.subr.mxu0 0.0
    %120 = vmatpush1.msra.mxu0 0.0
    %121 = vmatprep.subr.mxu0 0.0
    %122 = vmatpush1.msra.mxu0 0.0
    %123 = vmatprep.subr.mxu0 0.0
    %124 = vmatpush1.msra.mxu0 0.0
    %125 = vmatprep.subr.mxu0 0.0
    %126 = vmatpush1.msra.mxu0 0.0
    %127 = vmatprep.subr.mxu0 0.0
    %128 = vmatpush1.msra.mxu0 0.0
    %129 = vmatprep.subr.mxu0 0.0
    %130 = vmatpush1.msra.mxu0 0.0
    %131 = vmatprep.subr.mxu0 0.0
    %132 = vmatpush1.msra.mxu0 0.0
    %133 = vmatprep.subr.mxu0 0.0
    %134 = vmatpush1.msra.mxu0 0.0
    %135 = vmatprep.subr.mxu0 0.0
    %136 = vmatpush1.msra.mxu0 0.0
    %137 = vmatprep.subr.mxu0 0.0
    %138 = vmatpush1.msra.mxu0 %v101
    %139 = vmatprep.subr.mxu0 0.0
    %140 = vmatpush1.msra.mxu0 %v100
    %141 = vmatprep.subr.mxu0 0.0
    %142 = vmatpush1.msra.mxu0 %v99
    %143 = vmatprep.subr.mxu0 0.0
    %144 = vmatpush1.msra.mxu0 %v98
    %145 = vmatprep.subr.mxu0 0.0
    %146 = vmatpush2.msra.mxu0 0.0
    %147 = vmatprep.subr.mxu0 0.0
    %148 = vmatpush2.msra.mxu0 0.0
    %149 = vmatprep.subr.mxu0 0.0
    %150 = vmatpush2.msra.mxu0 0.0
    %151 = vmatprep.subr.mxu0 0.0
    %152 = vmatpush2.msra.mxu0 0.0
    %153 = vmatprep.subr.mxu0 0.0
    %154 = vmatpush2.msra.mxu0 0.0
    %155 = vmatprep.subr.mxu0 0.0
    %156 = vmatpush2.msra.mxu0 0.0
    %157 = vmatprep.subr.mxu0 0.0
    %158 = vmatpush2.msra.mxu0 0.0
    %159 = vmatprep.subr.mxu0 0.0
    %160 = vmatpush2.msra.mxu0 0.0
    %161 = vmatprep.subr.mxu0 0.0
    %162 = vmatpush2.msra.mxu0 0.0
    %163 = vmatprep.subr.mxu0 0.0
    %164 = vmatpush2.msra.mxu0 0.0
    %165 = vmatprep.subr.mxu0 0.0
    %166 = vmatpush2.msra.mxu0 0.0
    %167 = vmatprep.subr.mxu0 0.0
    %168 = vmatpush2.msra.mxu0 0.0
    %169 = vmatprep.subr.mxu0 0.0
    %170 = vmatpush2.msra.mxu0 0.0
    %171 = vmatprep.subr.mxu0 0.0
    %172 = vmatpush2.msra.mxu0 0.0
    %173 = vmatprep.subr.mxu0 0.0
    %174 = vmatpush2.msra.mxu0 0.0
    %175 = vmatprep.subr.mxu0 0.0
    %176 = vmatpush2.msra.mxu0 0.0
    %177 = vmatprep.mubr.f32.mxu0 0.0
    %178 = vmatmul.mubr.f32.gmra.mxu0 %v111
    %v179 = vpop.f32.mrf.mxu0
    %v180 = vadd.f32 %v107, %v179
    %v181 = vpop.f32.mrf.mxu0
    %182 = vdwg.mxu0
    %v183 = vmax.f32 %v180, 0.0
    %v184 = vld [vmem:[%s5] sm:$0xff]
    %v185 = vld [vmem:[%s5 + $0x8] sm:$0xff]
    %v186 = vld [vmem:[%s5 + $0x10] sm:$0xff]
    %v187 = vld [vmem:[%s5 + $0x18] sm:$0xff]
    %v188 = vld [vmem:[%s6] sm:$0x1]
    %v190 = vlaneseq
    %v191 = vshrl.u32 %v190, 7
    %v192 = vsub.s32 0, %v191
    %v193 = vrot.slane %v188, %v192
    %v196 = vsel %vm109, %v183, 0
    %198 = vmatprep.subr.mxu0 0.0
    %199 = vmatpush1.msra.mxu0 0.0
    %200 = vmatprep.subr.mxu0 0.0
    %201 = vmatpush1.msra.mxu0 0.0
    %202 = vmatprep.subr.mxu0 0.0
    %203 = vmatpush1.msra.mxu0 0.0
    %204 = vmatprep.subr.mxu0 0.0
    %205 = vmatpush1.msra.mxu0 0.0
    %206 = vmatprep.subr.mxu0 0.0
    %207 = vmatpush1.msra.mxu0 0.0
    %208 = vmatprep.subr.mxu0 0.0
    %209 = vmatpush1.msra.mxu0 0.0
    %210 = vmatprep.subr.mxu0 0.0
    %211 = vmatpush1.msra.mxu0 0.0
    %212 = vmatprep.subr.mxu0 0.0
    %213 = vmatpush1.msra.mxu0 0.0
    %214 = vmatprep.subr.mxu0 0.0
    %215 = vmatpush1.msra.mxu0 0.0
    %216 = vmatprep.subr.mxu0 0.0
    %217 = vmatpush1.msra.mxu0 0.0
    %218 = vmatprep.subr.mxu0 0.0
    %219 = vmatpush1.msra.mxu0 0.0
    %220 = vmatprep.subr.mxu0 0.0
    %221 = vmatpush1.msra.mxu0 0.0
    %222 = vmatprep.subr.mxu0 0.0
    %223 = vmatpush1.msra.mxu0 %v187
    %224 = vmatprep.subr.mxu0 0.0
    %225 = vmatpush1.msra.mxu0 %v186
    %226 = vmatprep.subr.mxu0 0.0
    %227 = vmatpush1.msra.mxu0 %v185
    %228 = vmatprep.subr.mxu0 0.0
    %229 = vmatpush1.msra.mxu0 %v184
    %230 = vmatprep.subr.mxu0 0.0
    %231 = vmatpush2.msra.mxu0 0.0
    %232 = vmatprep.subr.mxu0 0.0
    %233 = vmatpush2.msra.mxu0 0.0
    %234 = vmatprep.subr.mxu0 0.0
    %235 = vmatpush2.msra.mxu0 0.0
    %236 = vmatprep.subr.mxu0 0.0
    %237 = vmatpush2.msra.mxu0 0.0
    %238 = vmatprep.subr.mxu0 0.0
    %239 = vmatpush2.msra.mxu0 0.0
    %240 = vmatprep.subr.mxu0 0.0
    %241 = vmatpush2.msra.mxu0 0.0
    %242 = vmatprep.subr.mxu0 0.0
    %243 = vmatpush2.msra.mxu0 0.0
    %244 = vmatprep.subr.mxu0 0.0
    %245 = vmatpush2.msra.mxu0 0.0
    %246 = vmatprep.subr.mxu0 0.0
    %247 = vmatpush2.msra.mxu0 0.0
    %248 = vmatprep.subr.mxu0 0.0
    %249 = vmatpush2.msra.mxu0 0.0
    %250 = vmatprep.subr.mxu0 0.0
    %251 = vmatpush2.msra.mxu0 0.0
    %252 = vmatprep.subr.mxu0 0.0
    %253 = vmatpush2.msra.mxu0 0.0
    %254 = vmatprep.subr.mxu0 0.0
    %255 = vmatpush2.msra.mxu0 0.0
    %256 = vmatprep.subr.mxu0 0.0
    %257 = vmatpush2.msra.mxu0 0.0
    %258 = vmatprep.subr.mxu0 0.0
    %259 = vmatpush2.msra.mxu0 0.0
    %260 = vmatprep.subr.mxu0 0.0
    %261 = vmatpush2.msra.mxu0 0.0
    %262 = vmatprep.mubr.f32.mxu0 0.0
    %263 = vmatmul.mubr.f32.gmra.mxu0 %v196
    %v264 = vpop.f32.mrf.mxu0
    %v265 = vadd.f32 %v193, %v264
    %v266 = vpop.f32.mrf.mxu0
    %267 = vdwg.mxu0
    %vm268 = vcmask 125952
    %269 = vst.msk [vmem:[#allocation2] sm:$0xf] %vm268, %v265
    // Predicated region
    $region30: #{metadata_fc_block_forward.1} parent=1 // pred_check
      _
    $region31: #{metadata_fc_block_forward.1} parent=1 // pred_check_branch
      %271 = sbr.rel (0) target = $region33
    $region32: #{metadata_fc_block_forward.1} parent=1 // pred_region
      %s273 = ssub.s32 64, 64
      %274 = vsyncadd [#allocation3], %s273
      %s276 = sshll.u32 [#allocation2], 4
      %s277 = int_to_ptr.vmem [resolvable:$true] %s276
      %279 = dma.vmem_to_hbm [thread:$0]  %s277, 64, %s7, [#allocation3]
    $region33: #{metadata_fc_block_forward.1} parent=1 // pred_fallthru
      _
    // Predicated region
    $region34: #{metadata_fc_block_forward.1} parent=1 // pred_check
      _
    $region35: #{metadata_fc_block_forward.1} parent=1 // pred_check_branch
      %281 = sbr.rel (0) target = $region37
    $region36: #{metadata_fc_block_forward.1} parent=1 // pred_region
      %282 = dma.done [#allocation3], 64
    $region37: #{metadata_fc_block_forward.1} parent=1 // pred_fallthru
      _
    %283 = vsyncpa [#allocation3], 1

</llo_original>
